<compile_context>
chip_gen: v6e
topology: v6e:2x2x1
jax: 0.10.0
libtpu: 0.0.40
codegen_flags: <defaults>
</compile_context>

<pallas_src>
import functools
import math

import jax
import jax.numpy as jnp
from jax.experimental import pallas as pl
from jax.experimental.pallas import tpu as pltpu


def _xlogy_scalar(v):
    return v * math.log(v) if v > 0.0 else 0.0


def _round_up(x, m):
    return ((x + m - 1) // m) * m


def _label_smoothing_kernel(pred_ref, tgt_ref, out_ref, acc_ref, *,
                            confidence, uniform, batch_size):
    i = pl.program_id(1)           # batch-tile axis (reduction / accumulator axis)
    n_inner = pl.num_programs(1)
    tile_b = acc_ref.shape[0]

    @pl.when(i == 0)
    def _init():
        acc_ref[...] = jnp.zeros_like(acc_ref)

    # Global row offset of this tile (UNclamped; used only for the validity mask,
    # so clamped "extra" tiles on a second core contribute exactly zero).
    tile_idx = pl.program_id(0) * n_inner + i
    row_start = tile_idx * tile_b

    logits = pred_ref[...].astype(jnp.float32)                        # (tile_b, C)

    # log-softmax pieces (class dim = lanes).
    m = jnp.max(logits, axis=1, keepdims=True)                        # (tile_b, 1)
    shifted = logits - m
    lse = jnp.log(jnp.sum(jnp.exp(shifted), axis=1, keepdims=True))   # (tile_b, 1)

    # Fused row reduction: uniform*C + confidence == 1  =>
    #   sum_c q*log_softmax(x) = sum_c shifted*(uniform + confidence*[c==tgt]) - lse
    tgt = tgt_ref[...]                                                 # (tile_b, 1) int32
    classes = jax.lax.broadcasted_iota(jnp.int32, logits.shape, 1)
    w = jnp.where(classes == tgt, confidence + uniform, uniform)
    contrib = jnp.sum(shifted * w, axis=1, keepdims=True) - lse        # (tile_b, 1)

    # Mask rows past the real batch (ragged last tile / unused core-split tiles).
    local = jax.lax.broadcasted_iota(jnp.int32, (tile_b, 1), 0)
    valid = (row_start + local) < batch_size
    acc_ref[...] += jnp.where(valid, contrib, 0.0)

    @pl.when(i == n_inner - 1)
    def _finalize():
        out_ref[...] = jnp.broadcast_to(jnp.sum(acc_ref[...]), out_ref.shape)


def _vmem_capacity_bytes():
    try:
        return int(pltpu.get_tpu_info().vmem_capacity_bytes)
    except Exception:
        return 64 << 20            # conservative fallback (v7x per-TC VMEM)


def _num_core_splits():
    try:
        kind = jax.devices()[0].device_kind.lower()
    except Exception:
        return 1
    # v7x has two TensorCores per chip; v5e / v6e have one.
    return 2 if any(tag in kind for tag in ("v7", "7x")) else 1


def _pick_tile_b(B, C, pred_dtype, vmem_cap):
    """Byte-based batch-tile sizing from the chip's VMEM capacity."""
    dtype_bytes = jnp.dtype(pred_dtype).itemsize
    sub = max(8, 32 // dtype_bytes)          # sublane packing: 8 f32 / 16 bf16 / 32 int8
    lanes = _round_up(C, 128)                # lane padding of the class dim in VMEM
    budget = int(0.65 * vmem_cap)
    # Per-row VMEM bytes:
    #   pred tile        : 2 (double-buffer) * lanes * dtype_bytes
    #   target tile      : 2 (double-buffer) * 128 lanes * 4 B (int32, lane-padded)
    #   accumulator col  : 128 lanes * 4 B
    #   elementwise temps: ~6 lane-padded f32 tiles (shifted / exp / iota / mask / w / prod)
    per_row = (2 * lanes * dtype_bytes) + (2 * 128 * 4) + (128 * 4) + (6 * lanes * 4)
    tile_b = budget // per_row
    tile_b = max(sub, (tile_b // sub) * sub)
    tile_b = min(tile_b, 1 << 16)
    tile_b = min(tile_b, max(sub, _round_up(B, sub)))   # never bigger than the batch
    return tile_b


def label_smoothing_loss(pred, target, *, n_classes, smoothing=0.0):
    """Equivalent of LabelSmoothingLoss(n_classes, smoothing)(pred, target).

    pred:   (B, C) float logits
    target: (B,)   int class indices
    returns scalar float32 loss
    """
    B, C = pred.shape
    assert C == n_classes
    confidence = 1.0 - float(smoothing)
    uniform = float(smoothing) / n_classes
    # sum_c q*log(q) is identical for every row -> compile-time constant.
    const_row = _xlogy_scalar(confidence + uniform) + (n_classes - 1) * _xlogy_scalar(uniform)

    vmem_cap = _vmem_capacity_bytes()
    tile_b = _pick_tile_b(B, C, pred.dtype, vmem_cap)

    n_tiles = -(-B // tile_b)                      # cdiv — no padding of pred
    n_core_splits = min(_num_core_splits(), n_tiles)
    n_inner = -(-n_tiles // n_core_splits)
    last_tile = n_tiles - 1

    tgt2d = target.astype(jnp.int32).reshape(B, 1)

    def _in_block_map(c, i):
        # Clamp so an unused tile on the second core never indexes past the array;
        # the in-kernel row mask (from the UNclamped index) zeroes its contribution.
        return (jnp.minimum(c * n_inner + i, last_tile), 0)

    kernel = functools.partial(
        _label_smoothing_kernel,
        confidence=confidence,
        uniform=uniform,
        batch_size=B,
    )

    if n_core_splits > 1 and hasattr(pltpu, "CORE_PARALLEL"):
        dims_sem = (pltpu.CORE_PARALLEL, pltpu.ARBITRARY)
    elif n_core_splits > 1:
        dims_sem = ("parallel", "arbitrary")
    else:
        dims_sem = ("arbitrary", "arbitrary")

    vmem_limit = int(min(0.9 * vmem_cap, 0.65 * vmem_cap + (32 << 20)))

    out = pl.pallas_call(
        kernel,
        out_shape=jax.ShapeDtypeStruct((n_core_splits, 8, 128), jnp.float32),
        grid_spec=pltpu.PrefetchScalarGridSpec(
            num_scalar_prefetch=0,
            grid=(n_core_splits, n_inner),
            in_specs=[
                # pred: one (tile_b, C) tile per grid step, native dtype through the DMA.
                pl.BlockSpec((tile_b, C), _in_block_map),
                # target ids: small per-step tile (charged against the VMEM budget).
                pl.BlockSpec((tile_b, 1), _in_block_map),
            ],
            out_specs=pl.BlockSpec((1, 8, 128), lambda c, i: (c, 0, 0)),
            scratch_shapes=[pltpu.VMEM((tile_b, 1), jnp.float32)],
        ),
        compiler_params=pltpu.CompilerParams(
            dimension_semantics=dims_sem,
            vmem_limit_bytes=vmem_limit,
        ),
    )(pred, tgt2d)

    partial_sums = out[:, 0, 0]                    # one partial sum per core split
    # loss = mean_row[ sum_c q*log q ] - (1/B) * sum_rows sum_c q*log_softmax(pred)
    return jnp.float32(const_row) - jnp.sum(partial_sums) / jnp.float32(B)


def _reference(pred, target, n_classes, smoothing):
    # Pure-JAX reference mirroring the PyTorch module (kl_div + log_softmax, batchmean).
    confidence = 1.0 - smoothing
    B, C = pred.shape
    onehot = jax.nn.one_hot(target, C, dtype=pred.dtype) * confidence
    q = onehot + smoothing / n_classes
    logp = jax.nn.log_softmax(pred, axis=1)
    q_logq = jnp.where(q > 0, q * jnp.log(jnp.where(q > 0, q, 1.0)), 0.0)
    return jnp.sum(q_logq - q * logp) / B


if __name__ == "__main__":
    key = jax.random.PRNGKey(0)
    B, C = 16, 32          # batch=16, n_classes=32
    smoothing = 0.1

    k1, k2 = jax.random.split(key)
    pred = jax.random.normal(k1, (B, C), dtype=jnp.float32)
    target = jax.random.randint(k2, (B,), 0, C, dtype=jnp.int32)

    loss = label_smoothing_loss(pred, target, n_classes=C, smoothing=smoothing)
    loss = jax.block_until_ready(loss)

    ref = _reference(pred, target, C, smoothing)
    assert jnp.allclose(loss, ref, rtol=2e-5, atol=2e-5), (loss, ref)

    print("KERNEL_OK")
</pallas_src>

<mosaic_0001>
module attributes {stable_mosaic.version = 11 : i64} {
  func.func @_label_smoothing_kernel(%arg0: i32, %arg1: i32, %arg2: memref<16x32xf32, #tpu.memory_space<vmem>>, %arg3: memref<16x1xi32, #tpu.memory_space<vmem>>, %arg4: memref<1x8x128xf32, #tpu.memory_space<vmem>>, %arg5: memref<16x1xf32, #tpu.memory_space<vmem>>) attributes {dimension_semantics = [#tpu.dimension_semantics<arbitrary>, #tpu.dimension_semantics<arbitrary>], iteration_bounds = array<i64: 1, 1>, scalar_prefetch = 0 : i64, scratch_operands = 1 : i64, tpu.core_type = #tpu.core_type<tc>, window_params = [{transform_indices = @transform_0, window_bounds = array<i64: 16, 32>}, {transform_indices = @transform_1, window_bounds = array<i64: 16, 1>}, {transform_indices = @transform_2, window_bounds = array<i64: 1, 8, 128>}]} {
    %c0_i32 = arith.constant 0 : i32
    %0 = arith.cmpi eq, %arg1, %c0_i32 : i32
    %1 = arith.extui %0 : i1 to i32
    %c0_i32_0 = arith.constant 0 : i32
    %2 = arith.cmpi ne, %1, %c0_i32_0 : i32
    scf.if %2 {
      %cst_16 = arith.constant 0.000000e+00 : f32
      %39 = vector.broadcast %cst_16 : f32 to vector<16x1xf32>
      %c0_17 = arith.constant 0 : index
      %c0_18 = arith.constant 0 : index
      %40 = vector.load %arg5[%c0_17, %c0_18] : memref<16x1xf32, #tpu.memory_space<vmem>>, vector<16x1xf32>
      tpu.vector_store %arg5[%c0_17, %c0_18], %39 {strides = array<i32>} : memref<16x1xf32, #tpu.memory_space<vmem>>, vector<16x1xf32>,
    } else {
    }
    %c1_i32 = arith.constant 1 : i32
    %3 = arith.muli %arg0, %c1_i32 : i32
    %4 = arith.addi %3, %arg1 : i32
    %c16_i32 = arith.constant 16 : i32
    %5 = arith.muli %4, %c16_i32 : i32
    %c0 = arith.constant 0 : index
    %c0_1 = arith.constant 0 : index
    %6 = vector.load %arg2[%c0, %c0_1] : memref<16x32xf32, #tpu.memory_space<vmem>>, vector<16x32xf32>
    %cst = arith.constant dense<0xFF800000> : vector<16xf32>
    %7 = vector.multi_reduction <maximumf>, %6, %cst [1] : vector<16x32xf32> to vector<16xf32>
    %8 = vector.shape_cast %7 : vector<16xf32> to vector<16x1xf32>
    %9 = vector.broadcast %8 : vector<16x1xf32> to vector<16x32xf32>
    %10 = arith.subf %6, %9 : vector<16x32xf32>
    %11 = math.exp %10 : vector<16x32xf32>
    %cst_2 = arith.constant dense<0.000000e+00> : vector<16xf32>
    %12 = vector.multi_reduction <add>, %11, %cst_2 [1] : vector<16x32xf32> to vector<16xf32>
    %13 = vector.shape_cast %12 : vector<16xf32> to vector<16x1xf32>
    %14 = math.log %13 : vector<16x1xf32>
    %c0_3 = arith.constant 0 : index
    %c0_4 = arith.constant 0 : index
    %15 = vector.load %arg3[%c0_3, %c0_4] : memref<16x1xi32, #tpu.memory_space<vmem>>, vector<16x1xi32>
    %16 = tpu.iota {dimensions = array<i32: 1>} : vector<16x32xi32>
    %17 = vector.broadcast %15 : vector<16x1xi32> to vector<16x32xi32>
    %18 = arith.cmpi eq, %16, %17 : vector<16x32xi32>
    %cst_5 = arith.constant 0.903124988 : f32
    %cst_6 = arith.constant 3.125000e-03 : f32
    %19 = vector.broadcast %cst_5 : f32 to vector<16x32xf32>
    %20 = vector.broadcast %cst_6 : f32 to vector<16x32xf32>
    %21 = arith.select %18, %19, %20 : vector<16x32xi1>, vector<16x32xf32>
    %22 = arith.mulf %10, %21 : vector<16x32xf32>
    %cst_7 = arith.constant dense<0.000000e+00> : vector<16xf32>
    %23 = vector.multi_reduction <add>, %22, %cst_7 [1] : vector<16x32xf32> to vector<16xf32>
    %24 = vector.shape_cast %23 : vector<16xf32> to vector<16x1xf32>
    %25 = arith.subf %24, %14 : vector<16x1xf32>
    %26 = tpu.iota {dimensions = array<i32: 0>} : vector<16x1xi32>
    %27 = vector.broadcast %5 : i32 to vector<16x1xi32>
    %28 = arith.addi %27, %26 : vector<16x1xi32>
    %c16_i32_8 = arith.constant 16 : i32
    %29 = vector.broadcast %c16_i32_8 : i32 to vector<16x1xi32>
    %30 = arith.cmpi slt, %28, %29 : vector<16x1xi32>
    %c0_9 = arith.constant 0 : index
    %c0_10 = arith.constant 0 : index
    %31 = vector.load %arg5[%c0_9, %c0_10] : memref<16x1xf32, #tpu.memory_space<vmem>>, vector<16x1xf32>
    %cst_11 = arith.constant 0.000000e+00 : f32
    %32 = vector.broadcast %cst_11 : f32 to vector<16x1xf32>
    %33 = arith.select %30, %25, %32 : vector<16x1xi1>, vector<16x1xf32>
    %34 = arith.addf %31, %33 : vector<16x1xf32>
    %c0_12 = arith.constant 0 : index
    %c0_13 = arith.constant 0 : index
    %35 = vector.load %arg5[%c0_12, %c0_13] : memref<16x1xf32, #tpu.memory_space<vmem>>, vector<16x1xf32>
    tpu.vector_store %arg5[%c0_12, %c0_13], %34 {strides = array<i32>} : memref<16x1xf32, #tpu.memory_space<vmem>>, vector<16x1xf32>,
    %c0_i32_14 = arith.constant 0 : i32
    %36 = arith.cmpi eq, %arg1, %c0_i32_14 : i32
    %37 = arith.extui %36 : i1 to i32
    %c0_i32_15 = arith.constant 0 : i32
    %38 = arith.cmpi ne, %37, %c0_i32_15 : i32
    scf.if %38 {
      %c0_16 = arith.constant 0 : index
      %c0_17 = arith.constant 0 : index
      %39 = vector.load %arg5[%c0_16, %c0_17] : memref<16x1xf32, #tpu.memory_space<vmem>>, vector<16x1xf32>
      %40 = vector.shape_cast %39 : vector<16x1xf32> to vector<1x16x1xf32>
      %cst_18 = arith.constant dense<0.000000e+00> : vector<1xf32>
      %41 = vector.multi_reduction <add>, %40, %cst_18 [1, 2] : vector<1x16x1xf32> to vector<1xf32>
      %42 = vector.shape_cast %41 : vector<1xf32> to vector<1x1x1xf32>
      %43 = vector.extract %42[0, 0, 0] : f32 from vector<1x1x1xf32>
      %44 = vector.broadcast %43 : f32 to vector<1x8x128xf32>
      %c0_19 = arith.constant 0 : index
      %c0_20 = arith.constant 0 : index
      %c0_21 = arith.constant 0 : index
      %45 = vector.load %arg4[%c0_19, %c0_20, %c0_21] : memref<1x8x128xf32, #tpu.memory_space<vmem>>, vector<1x8x128xf32>
      tpu.vector_store %arg4[%c0_19, %c0_20, %c0_21], %44 {strides = array<i32>} : memref<1x8x128xf32, #tpu.memory_space<vmem>>, vector<1x8x128xf32>,
    } else {
    }
    return
  }
  func.func @transform_0(%arg0: i32, %arg1: i32) -> (i32, i32) {
    %c1_i32 = arith.constant 1 : i32
    %0 = arith.muli %arg0, %c1_i32 : i32
    %1 = arith.addi %0, %arg1 : i32
    %c0_i32 = arith.constant 0 : i32
    %2 = arith.minsi %1, %c0_i32 : i32
    %c0_i32_0 = arith.constant 0 : i32
    %c0_i32_1 = arith.constant 0 : i32
    return %2, %c0_i32_0 : i32, i32
  }
  func.func @transform_1(%arg0: i32, %arg1: i32) -> (i32, i32) {
    %c1_i32 = arith.constant 1 : i32
    %0 = arith.muli %arg0, %c1_i32 : i32
    %1 = arith.addi %0, %arg1 : i32
    %c0_i32 = arith.constant 0 : i32
    %2 = arith.minsi %1, %c0_i32 : i32
    %c0_i32_0 = arith.constant 0 : i32
    %c0_i32_1 = arith.constant 0 : i32
    return %2, %c0_i32_0 : i32, i32
  }
  func.func @transform_2(%arg0: i32, %arg1: i32) -> (i32, i32, i32) {
    %c0_i32 = arith.constant 0 : i32
    %c0_i32_0 = arith.constant 0 : i32
    %c0_i32_1 = arith.constant 0 : i32
    return %arg0, %c0_i32, %c0_i32_0 : i32, i32, i32
  }
}

</mosaic_0001>

<llo_original>
// kernel: tpu_custom_call.1
$region0: #{tpu_custom_call.1}
  #allocation0 [shape = 'u32[]', space=smem, size = 0x4, offset = 0x4, fixed_abs, tag = 'smem constant byte address 0x4 - core index']
  #allocation1 [shape = 'u32[144,128]{1,0:T(1,128)}', space=vmem, size = 0x12000, scoped, tag = 'internal scratch']
  #allocation2 [shape = 'f32[16,1]{1,0:T(8,128)}', space=vmem, size = 0x2000, scoped, tag = 'scratch operand']
  %s0 = inlined_call_operand.vmem [shape: f32[16,32], index: 0, kind: input, shape index: {}]
  %s1 = inlined_call_operand.vmem [shape: s32[16,1], index: 1, kind: input, shape index: {}]
  %s2 = inlined_call_operand.hbm [shape: f32[1,8,128], index: 2, kind: output, shape index: {}]
  %s3 = sld [smem:[#allocation0]]
  $region26: #{tpu_custom_call.1} parent=0
    _
  %s5 = ssub.s32 1, %s3
  %s6 = scalar_select 0, %s5, %s3
  $region1: #{tpu_custom_call.1} parent=0
    #allocation3 [shape = 'u8[4096]{0}', space=vmem, size = 0x1000, scoped, tag = 'output window, operand 0, single buffered']
    #allocation4 [shape = 's32[1]{0}', space=sflag, size = 0x4, scoped, tag = 'scoped memory for tpu_custom_call.1']
    %7 = vsyncpa [#allocation4], 0
    // Predicated region
    $region2: #{tpu_custom_call.1} parent=1 // pred_check
      _
    $region3: #{tpu_custom_call.1} parent=1 // pred_check_branch
      %9 = sbr.rel (0) target = $region5
    $region4: #{tpu_custom_call.1} parent=1 // pred_region
      %s10 = sadd.s32 0, 0
      %p11 = scmp.lt.s32.totalorder %s10, 0
      %s12 = scalar_select %p11, %s10, 0
      %s13 = smul.u32 2, %s12
      %p14 = scmp.lt.s32.totalorder %s13, 1
      %s15 = scalar_select %p14, %s13, 1
      %s16 = smul.addr %s15, 8
      %s17 = scalar_lea.vmem %s0, %s16
      %s18 = sadd.s32 0, 0
      %p19 = scmp.lt.s32.totalorder %s18, 0
      %s20 = scalar_select %p19, %s18, 0
      %s21 = smul.u32 2, %s20
    $region5: #{tpu_custom_call.1} parent=1 // pred_fallthru
      _
    // Predicated region
    $region6: #{tpu_custom_call.1} parent=1 // pred_check
      _
    $region7: #{tpu_custom_call.1} parent=1 // pred_check_branch
      %23 = sbr.rel (0) target = $region9
    $region8: #{tpu_custom_call.1} parent=1 // pred_region
      %s24 = sadd.s32 0, 0
      %p25 = scmp.lt.s32.totalorder %s24, 0
      %s26 = scalar_select %p25, %s24, 0
      %s27 = smul.u32 2, %s26
      %p28 = scmp.lt.s32.totalorder %s27, 1
      %s29 = scalar_select %p28, %s27, 1
      %s30 = smul.addr %s29, 8
      %s31 = scalar_lea.vmem %s1, %s30
      %s32 = sadd.s32 0, 0
      %p33 = scmp.lt.s32.totalorder %s32, 0
      %s34 = scalar_select %p33, %s32, 0
      %s35 = smul.u32 2, %s34
    $region9: #{tpu_custom_call.1} parent=1 // pred_fallthru
      _
    %s36 = sadd.s32 0, 0
    %p37 = scmp.lt.s32.totalorder %s36, 0
    %s38 = scalar_select %p37, %s36, 0
    %s39 = smul.u32 2, %s38
    %p40 = scmp.lt.s32.totalorder %s39, 1
    %s41 = scalar_select %p40, %s39, 1
    %s42 = smul.addr %s41, 8
    %s43 = scalar_lea.vmem %s0, %s42
    %s44 = sadd.s32 0, 0
    %p45 = scmp.lt.s32.totalorder %s44, 0
    %s46 = scalar_select %p45, %s44, 0
    %s47 = smul.u32 2, %s46
    %p48 = scmp.lt.s32.totalorder %s47, 1
    %s49 = scalar_select %p48, %s47, 1
    %s50 = smul.addr %s49, 8
    %s51 = scalar_lea.vmem %s1, %s50
    %s52 = sadd.s32 0, 0
    %p53 = scmp.lt.s32.totalorder %s52, 0
    %s54 = scalar_select %p53, %s52, 0
    %s55 = smul.u32 2, %s54
    %p56 = scmp.lt.s32.totalorder %s55, 1
    %s57 = scalar_select %p56, %s55, 1
    %s58 = smul.addr %s57, 8
    %s59 = scalar_lea.vmem %s0, %s58
    %s60 = sadd.s32 0, 0
    %p61 = scmp.lt.s32.totalorder %s60, 0
    %s62 = scalar_select %p61, %s60, 0
    %s63 = smul.u32 2, %s62
    %s64 = sadd.s32 0, 0
    %p65 = scmp.lt.s32.totalorder %s64, 0
    %s66 = scalar_select %p65, %s64, 0
    %s67 = smul.u32 2, %s66
    %p68 = scmp.lt.s32.totalorder %s67, 1
    %s69 = scalar_select %p68, %s67, 1
    %s70 = smul.addr %s69, 8
    %s71 = scalar_lea.vmem %s1, %s70
    %s72 = sadd.s32 0, 0
    %p73 = scmp.lt.s32.totalorder %s72, 0
    %s74 = scalar_select %p73, %s72, 0
    %s75 = smul.u32 2, %s74
    %p76 = scmp.eq.s32.totalorder 0, 0
    // Predicated region
    $region10: #{tpu_custom_call.1} parent=1 // pred_check
      %p77 = pneg %p76
    $region11: #{tpu_custom_call.1} parent=1 // pred_check_branch
      %79 = sbr.rel (%p77) target = $region13
    $region12: #{tpu_custom_call.1} parent=1 // pred_region
      %vm80 = vcmask 7168
      %81 = vst.msk [vmem:[#allocation2] sm:$0xff] %vm80, 0.0
      %82 = vst.msk [vmem:[#allocation2 + $0x8] sm:$0xff] %vm80, 0.0
    $region13: #{tpu_custom_call.1} parent=1 // pred_fallthru
      _
    %s83 = sadd.s32 0, 0
    %s84 = smul.u32 %s83, 16
    %v85 = vld [vmem:[%s59] sm:$0xff]
    %v86 = vld [vmem:[%s59 + $0x8] sm:$0xff]
    %vm87 = vcmask 261120
    %v88 = vsel %vm87, %v85, -inf
    %89 = vmax.xlane.f32.xlu0 %v88
    %v90 = vpop.xlane.xlu0 %89
    %v91 = vsel %vm87, %v86, -inf
    %92 = vmax.xlane.f32.xlu0 %v91
    %v93 = vpop.xlane.xlu0 %92
    %v94 = vsub.f32 %v85, %v90
    %v95 = vsub.f32 %v86, %v93
    %v96 = vmul.f32 %v94, 1.442695
    %v97 = vpow.pop %v96
    %v98 = vmul.f32 %v95, 1.442695
    %v99 = vpow.pop %v98
    %v100 = vsel %vm87, %v97, 0.0
    %101 = vadd.xlane.f32.xlu0 %v100
    %v102 = vpop.xlane.xlu0 %101
    %v103 = vsel %vm87, %v99, 0.0
    %104 = vadd.xlane.f32.xlu0 %v103
    %v105 = vpop.xlane.xlu0 %104
    %v106 = vlog2.pop %v102
    %v107 = vmul.f32 %v106, 0.6931472
    %v108 = vlog2.pop %v105
    %v109 = vmul.f32 %v108, 0.6931472
    %v110 = vld [vmem:[%s71] sm:$0xff]
    %v111 = vld [vmem:[%s71 + $0x8] sm:$0xff]
    %v112 = vlaneseq
    %v113 = vand.u32 %v112, 127
    %114 = vset.pattern.permute.xlu0 0
    %115 = vperm.xlu0 %114, %v110
    %v116 = vpop.permute.xlu0 %115
    %117 = vset.pattern.permute.xlu0 0
    %118 = vperm.xlu0 %117, %v111
    %v119 = vpop.permute.xlu0 %118
    %vm120 = vcmp.eq.s32.totalorder %v113, %v116
    %vm121 = vcmp.eq.s32.totalorder %v113, %v119
    %v122 = vsel %vm120, 0.903125, 0.003125
    %v123 = vsel %vm121, 0.903125, 0.003125
    %v124 = vmul.f32 %v94, %v122
    %v125 = vmul.f32 %v95, %v123
    %v126 = vsel %vm87, %v124, 0.0
    %127 = vadd.xlane.f32.xlu0 %v126
    %v128 = vpop.xlane.xlu0 %127
    %v129 = vsel %vm87, %v125, 0.0
    %130 = vadd.xlane.f32.xlu0 %v129
    %v131 = vpop.xlane.xlu0 %130
    %v132 = vsub.f32 %v128, %v107
    %v133 = vsub.f32 %v131, %v109
    %v134 = vlaneseq
    %v135 = vshrl.u32 %v134, 7
    %v136 = vadd.s32 %v135, 8
    %v137 = vstv %s84
    %v138 = vadd.s32 %v137, %v135
    %v139 = vadd.s32 %v137, %v136
    %vm140 = vcmp.lt.s32.totalorder %v138, 16
    %vm141 = vcmp.lt.s32.totalorder %v139, 16
    %v142 = vld [vmem:[#allocation2] sm:$0xff]
    %v143 = vld [vmem:[#allocation2 + $0x8] sm:$0xff]
    %v144 = vsel %vm140, %v132, 0.0
    %v145 = vsel %vm141, %v133, 0.0
    %v146 = vadd.f32 %v142, %v144
    %v147 = vadd.f32 %v143, %v145
    %vm148 = vcmask 7168
    %149 = vst.msk [vmem:[#allocation2] sm:$0xff] %vm148, %v146
    %150 = vst.msk [vmem:[#allocation2 + $0x8] sm:$0xff] %vm148, %v147
    // Predicated region
    $region14: #{tpu_custom_call.1} parent=1 // pred_check
      %p151 = pneg %p76
    $region15: #{tpu_custom_call.1} parent=1 // pred_check_branch
      %153 = sbr.rel (%p151) target = $region17
    $region16: #{tpu_custom_call.1} parent=1 // pred_region
      %v154 = vld [vmem:[#allocation2] sm:$0xff]
      %v155 = vld [vmem:[#allocation2 + $0x8] sm:$0xff]
      %v156 = vsel %vm148, %v154, 0.0
      %v157 = vsel %vm148, %v155, 0.0
      %v158 = vadd.f32 %v156, %v157
      %159 = vadd.xlane.f32.xlu0 %v158
      %v160 = vpop.xlane.xlu0 %159
      %v161 = vrot.slane %v160, 4
      %v162 = vadd.f32 %v160, %v161
      %v163 = vrot.slane %v162, 2
      %v164 = vadd.f32 %v162, %v163
      %v165 = vrot.slane %v164, 1
      %v166 = vadd.f32 %v164, %v165
      %s167 = vtos %v166
      %v168 = vstv %s167
      %169 = vst [vmem:[#allocation3] sm:$0xff] %v168
    $region17: #{tpu_custom_call.1} parent=1 // pred_fallthru
      _
    // Predicated region
    $region18: #{tpu_custom_call.1} parent=1 // pred_check
      _
    $region19: #{tpu_custom_call.1} parent=1 // pred_check_branch
      %171 = sbr.rel (0) target = $region21
    $region20: #{tpu_custom_call.1} parent=1 // pred_region
      %s173 = ssub.s32 128, 128
      %174 = vsyncadd [#allocation4], %s173
      %s176 = sshll.u32 [#allocation3], 4
      %s177 = int_to_ptr.vmem [resolvable:$true] %s176
      %179 = dma.vmem_to_hbm [thread:$0]  %s177, 128, %s2, [#allocation4]
    $region21: #{tpu_custom_call.1} parent=1 // pred_fallthru
      _
    // Predicated region
    $region22: #{tpu_custom_call.1} parent=1 // pred_check
      _
    $region23: #{tpu_custom_call.1} parent=1 // pred_check_branch
      %181 = sbr.rel (0) target = $region25
    $region24: #{tpu_custom_call.1} parent=1 // pred_region
      %182 = dma.done [#allocation4], 128
    $region25: #{tpu_custom_call.1} parent=1 // pred_fallthru
      _
    %183 = vsyncpa [#allocation4], 1

</llo_original>
